<compile_context>
chip_gen: v7x
topology: tpu7x:2x2x1
jax: 0.10.0
libtpu: 0.0.40
codegen_flags: <defaults>
</compile_context>

<pallas_src>
import jax
import jax.numpy as jnp
from jax.experimental import pallas as pl
from jax.experimental.pallas import tpu as pltpu


def _identity_kernel(x_ref, o_ref):
    # Pure copy: load the current VMEM tile and store it to the output tile.
    o_ref[...] = x_ref[...]


_LANE = 128
_MAX_COLS = 2048                 # 1024-2048 lanes -> unmasked, lane-dense stores
_TARGET_BLOCK_BYTES = 2 << 20    # ~2 MiB per block (amortizes ~0.35 us/grid-step)


def identity_pallas(x: jax.Array) -> jax.Array:
    """Identity forward pass: returns x unchanged (same shape, same dtype)."""
    if x.size == 0:
        return x

    total = int(x.size)
    itemsize = int(jnp.dtype(x.dtype).itemsize)

    # ---- Lane-dense flatten: (rows, cols) with cols a multiple of 128 if possible.
    if total % _LANE == 0:
        cols = _LANE
        for cand in (_MAX_COLS, 1024, 512, 256, _LANE):
            if total % cand == 0:
                cols = cand
                break
        rows = total // cols
    else:
        # Not 128-divisible: single lane-major row; ragged last column block is
        # handled by Pallas (masked only on the final partial tile).
        rows, cols = 1, total
    x2d = x.reshape(rows, cols)

    # ---- Fixed tile sizes (ragged last blocks allowed; no full-dim fallback).
    tc = cols if cols <= _MAX_COLS else _MAX_COLS            # full or multiple of 128
    sub = max(8, 32 // max(itemsize, 1))                     # 8/16/32 for f32/bf16/i8
    max_tr = max(1, _TARGET_BLOCK_BYTES // (tc * itemsize))  # ~2 MiB budget per block
    if max_tr >= rows:
        tr = rows                                            # full extent is allowed
    else:
        tr = max(sub, (max_tr // sub) * sub)                 # multiple of packed sublane

    grid = (pl.cdiv(rows, tr), pl.cdiv(cols, tc))

    out2d = pl.pallas_call(
        _identity_kernel,
        out_shape=jax.ShapeDtypeStruct((rows, cols), x2d.dtype),
        grid_spec=pltpu.PrefetchScalarGridSpec(
            num_scalar_prefetch=0,
            grid=grid,
            in_specs=[pl.BlockSpec((tr, tc), lambda i, j: (i, j))],
            out_specs=pl.BlockSpec((tr, tc), lambda i, j: (i, j)),
        ),
        compiler_params=pltpu.CompilerParams(
            dimension_semantics=("parallel", "parallel")
        ),
    )(x2d)

    return out2d.reshape(x.shape)


if __name__ == "__main__":
    key = jax.random.PRNGKey(0)
    # Small NCHW input consistent with the module's typical conv-style usage.
    x = jax.random.normal(key, (2, 4, 16, 16), dtype=jnp.float32)

    identity = jax.jit(identity_pallas)
    y = jax.block_until_ready(identity(x))

    assert y.shape == x.shape, (y.shape, x.shape)
    assert y.dtype == x.dtype, (y.dtype, x.dtype)
    assert jnp.array_equal(y, x), "Identity kernel output mismatch"

    print("KERNEL_OK")
</pallas_src>

<mosaic_0001>
module attributes {stable_mosaic.version = 11 : i64} {
  func.func @_identity_kernel(%arg0: i32, %arg1: i32, %arg2: memref<1x2048xf32, #tpu.memory_space<vmem>>, %arg3: memref<1x2048xf32, #tpu.memory_space<vmem>>) attributes {dimension_semantics = [#tpu.dimension_semantics<parallel>, #tpu.dimension_semantics<parallel>], iteration_bounds = array<i64: 1, 1>, scalar_prefetch = 0 : i64, scratch_operands = 0 : i64, tpu.core_type = #tpu.core_type<tc>, window_params = [{transform_indices = @transform_0, window_bounds = array<i64: 1, 2048>}, {transform_indices = @transform_1, window_bounds = array<i64: 1, 2048>}]} {
    %c0 = arith.constant 0 : index
    %c0_0 = arith.constant 0 : index
    %0 = vector.load %arg2[%c0, %c0_0] : memref<1x2048xf32, #tpu.memory_space<vmem>>, vector<1x2048xf32>
    %c0_1 = arith.constant 0 : index
    %c0_2 = arith.constant 0 : index
    %1 = vector.load %arg3[%c0_1, %c0_2] : memref<1x2048xf32, #tpu.memory_space<vmem>>, vector<1x2048xf32>
    tpu.vector_store %arg3[%c0_1, %c0_2], %0 {strides = array<i32>} : memref<1x2048xf32, #tpu.memory_space<vmem>>, vector<1x2048xf32>,
    return
  }
  func.func @transform_0(%arg0: i32, %arg1: i32) -> (i32, i32) {
    %c0_i32 = arith.constant 0 : i32
    return %arg0, %arg1 : i32, i32
  }
  func.func @transform_1(%arg0: i32, %arg1: i32) -> (i32, i32) {
    %c0_i32 = arith.constant 0 : i32
    return %arg0, %arg1 : i32, i32
  }
}

</mosaic_0001>

<llo_original>
// kernel: identity_pallas.1
$region0: #{identity_pallas.1}
  #allocation0 [shape = 'u32[]', space=smem, size = 0x4, offset = 0x4, fixed_abs, tag = 'smem constant byte address 0x4 - core index']
  #allocation1 [shape = 'u32[144,128]{1,0:T(1,128)}', space=vmem, size = 0x12000, scoped, tag = 'internal scratch']
  %s0 = inlined_call_operand.vmem [shape: f32[1,2048], index: 0, kind: input, shape index: {}]
  %s1 = inlined_call_operand.vmem [shape: f32[1,2048], index: 1, kind: output, shape index: {}]
  %s2 = sld [smem:[#allocation0]]
  $region14: #{identity_pallas.1} parent=0
    _
  %s4 = ssub.s32 1, %s2
  %s5 = scalar_select 0, %s4, %s2
  // Predicated region
  $region2: #{identity_pallas.1} parent=0 // pred_check
    _
  $region3: #{identity_pallas.1} parent=0 // pred_check_branch
    %7 = sbr.rel (0) target = $region5
  $region4: #{identity_pallas.1} parent=0 // pred_region
    _
  $region5: #{identity_pallas.1} parent=0 // pred_fallthru
    _
  %v8 = vld [vmem:[%s0] sm:$0xff]
  %v9 = vld [vmem:[%s0 + $0x8] sm:$0xff]
  %10 = vst [vmem:[%s1] sm:$0xff] %v8
  %11 = vst [vmem:[%s1 + $0x8] sm:$0xff] %v9
  // Predicated region
  $region6: #{identity_pallas.1} parent=0 // pred_check
    _
  $region7: #{identity_pallas.1} parent=0 // pred_check_branch
    %13 = sbr.rel (0) target = $region9
  $region8: #{identity_pallas.1} parent=0 // pred_region
    _
  $region9: #{identity_pallas.1} parent=0 // pred_fallthru
    _
  // Predicated region
  $region10: #{identity_pallas.1} parent=0 // pred_check
    _
  $region11: #{identity_pallas.1} parent=0 // pred_check_branch
    %15 = sbr.rel (0) target = $region13
  $region12: #{identity_pallas.1} parent=0 // pred_region
    _
  $region13: #{identity_pallas.1} parent=0 // pred_fallthru
    _

</llo_original>
